<compile_context>
chip_gen: v7x
topology: tpu7x:2x2x1
jax: 0.10.0
libtpu: 0.0.40
codegen_flags: <defaults>
</compile_context>

<pallas_src>
import functools

import jax
import jax.numpy as jnp
from jax import lax
from jax.experimental import pallas as pl
from jax.experimental.pallas import tpu as pltpu


# The 8 off-center taps of the 3x3 stencil, in a fixed order shared by the
# kernel and the wrapper-side boundary-mask construction.
_TAPS = tuple((dh, dw) for dh in (-1, 0, 1) for dw in (-1, 0, 1)
              if (dh, dw) != (0, 0))


def _residual_dwconv_kernel(x_ref, w_ref, b_ref, m_ref, o_ref, *, W):
    """Depthwise 3x3 conv + folded BN + folded residual on a (TR, H*W) tile.

    x_ref: (TR, H*W) rows = flattened (n, c) pairs, lanes = h*W + w
    w_ref: (TR, 9)   folded conv*BN taps per row; +1 already folded into [:,4]
    b_ref: (TR, 1)   folded BN bias per row
    m_ref: (8, H*W)  per-tap boundary validity (1.0 inside, 0.0 at the edge)
    o_ref: (TR, H*W) output rows
    """
    HW = x_ref.shape[1]
    x = x_ref[...]

    # Center tap: BN scale and the residual identity (+1) are pre-folded, so
    # this single multiply initializes the accumulator (no zero-fill, no add).
    acc = x * w_ref[:, 4:5]

    # Off-center taps: cyclic lane roll (XLU) + boundary mask + weight (VPU).
    for t, (dh, dw) in enumerate(_TAPS):
        off = dh * W + dw                            # source offset along h*W+w
        shifted = pltpu.roll(x, shift=(-off) % HW, axis=1)
        k = (dh + 1) * 3 + (dw + 1)                  # tap column in w_ref
        acc = acc + shifted * w_ref[:, k:k + 1] * m_ref[t:t + 1, :]

    o_ref[...] = (acc + b_ref[...]).astype(o_ref.dtype)


def residual_forward(x_nchw, w_dw, bn_gamma, bn_beta, bn_mean, bn_var,
                     eps=1e-5):
    """y = x + BN(DWConv3x3(x)); DropPath in eval mode is the identity."""
    N, C, H, W = x_nchw.shape
    HW = H * W
    NC = N * C

    # --- Fold BatchNorm into the depthwise conv (Conv2d_BN fusion). ---
    scale = bn_gamma / jnp.sqrt(bn_var + eps)                 # (C,)
    w9 = (w_dw[:, 0] * scale[:, None, None]).reshape(C, 9)    # (C, 9)
    w9 = w9.at[:, 4].add(1.0)          # fold residual identity into center tap
    b = (bn_beta - bn_mean * scale).reshape(C, 1)             # (C, 1)

    # Per-row (= per (n, c) pair) parameters.
    w_rows = jnp.tile(w9, (N, 1))                             # (NC, 9)
    b_rows = jnp.tile(b, (N, 1))                              # (NC, 1)

    # --- Boundary-validity masks for the 8 off-center taps (tiny, f32). ---
    pos = jnp.arange(HW, dtype=jnp.int32)
    row = pos // W
    col = pos % W
    mask_rows = []
    for dh, dw in _TAPS:
        ok = jnp.ones((HW,), jnp.bool_)
        if dh == -1:
            ok = ok & (row >= 1)
        if dh == 1:
            ok = ok & (row <= H - 2)
        if dw == -1:
            ok = ok & (col >= 1)
        if dw == 1:
            ok = ok & (col <= W - 2)
        mask_rows.append(ok.astype(jnp.float32))
    masks = jnp.stack(mask_rows, axis=0)                      # (8, HW)

    # --- Layout: free reshape (no transpose, no spatial pad). ---
    x2 = x_nchw.reshape(NC, HW)

    # Row tile: 8 (n, c) rows per grid step -> full sublane occupancy and a
    # grid depth of NC/8 (pipeline depth scales with N*C for real workloads).
    TR = 8 if NC >= 8 else NC
    pad = (-NC) % TR
    if pad:
        x2 = jnp.pad(x2, ((0, pad), (0, 0)))
        w_rows = jnp.pad(w_rows, ((0, pad), (0, 0)))
        b_rows = jnp.pad(b_rows, ((0, pad), (0, 0)))
    NCp = NC + pad

    out2 = pl.pallas_call(
        functools.partial(_residual_dwconv_kernel, W=W),
        out_shape=jax.ShapeDtypeStruct((NCp, HW), x_nchw.dtype),
        grid=(NCp // TR,),
        in_specs=[
            pl.BlockSpec((TR, HW), lambda i: (i, 0)),   # x rows (lane-dense)
            pl.BlockSpec((TR, 9), lambda i: (i, 0)),    # folded conv*BN taps
            pl.BlockSpec((TR, 1), lambda i: (i, 0)),    # folded bias
            pl.BlockSpec((8, HW), lambda i: (0, 0)),    # shared tap masks
        ],
        out_specs=pl.BlockSpec((TR, HW), lambda i: (i, 0)),
        compiler_params=pltpu.CompilerParams(
            dimension_semantics=("parallel",)),
    )(x2, w_rows, b_rows, masks)

    return out2[:NC].reshape(N, C, H, W)


def _reference(x_nchw, w_dw, bn_gamma, bn_beta, bn_mean, bn_var, eps=1e-5):
    """Independent reference using lax.conv_general_dilated (depthwise)."""
    C = x_nchw.shape[1]
    conv = lax.conv_general_dilated(
        x_nchw, w_dw,
        window_strides=(1, 1), padding=((1, 1), (1, 1)),
        feature_group_count=C,
        dimension_numbers=("NCHW", "OIHW", "NCHW"))
    scale = bn_gamma / jnp.sqrt(bn_var + eps)
    bn = conv * scale[None, :, None, None] + \
        (bn_beta - bn_mean * scale)[None, :, None, None]
    return x_nchw + bn


if __name__ == "__main__":
    key = jax.random.PRNGKey(0)
    k_x, k_w, k_g, k_b, k_m, k_v = jax.random.split(key, 6)

    N, C, H, W = 2, 4, 16, 16
    x = jax.random.normal(k_x, (N, C, H, W), dtype=jnp.float32)

    # Deterministic parameters for the wrapped module:
    # depthwise Conv2d(C, C, 3, stride=1, pad=1, groups=C) + BatchNorm2d(C).
    w_dw = 0.1 * jax.random.normal(k_w, (C, 1, 3, 3), dtype=jnp.float32)
    bn_gamma = 1.0 + 0.05 * jax.random.normal(k_g, (C,), dtype=jnp.float32)
    bn_beta = 0.05 * jax.random.normal(k_b, (C,), dtype=jnp.float32)
    bn_mean = 0.05 * jax.random.normal(k_m, (C,), dtype=jnp.float32)
    bn_var = jnp.abs(1.0 + 0.05 * jax.random.normal(k_v, (C,), dtype=jnp.float32))

    fwd = jax.jit(residual_forward)   # fuse/elide the free reshapes around the kernel
    y = fwd(x, w_dw, bn_gamma, bn_beta, bn_mean, bn_var)
    y = jax.block_until_ready(y)

    y_ref = _reference(x, w_dw, bn_gamma, bn_beta, bn_mean, bn_var)
    assert jnp.allclose(y, y_ref, atol=1e-4, rtol=1e-4), "mismatch vs reference"

    print("KERNEL_OK")
</pallas_src>

<mosaic_0001>
module attributes {stable_mosaic.version = 11 : i64} {
  func.func @_residual_dwconv_kernel(%arg0: i32, %arg1: memref<8x256xf32, #tpu.memory_space<vmem>>, %arg2: memref<8x9xf32, #tpu.memory_space<vmem>>, %arg3: memref<8x1xf32, #tpu.memory_space<vmem>>, %arg4: memref<8x256xf32, #tpu.memory_space<vmem>>, %arg5: memref<8x256xf32, #tpu.memory_space<vmem>>) attributes {dimension_semantics = [#tpu.dimension_semantics<parallel>], iteration_bounds = array<i64: 1>, scalar_prefetch = 0 : i64, scratch_operands = 0 : i64, tpu.core_type = #tpu.core_type<tc>, window_params = [{transform_indices = @transform_0, window_bounds = array<i64: 8, 256>}, {transform_indices = @transform_1, window_bounds = array<i64: 8, 9>}, {transform_indices = @transform_2, window_bounds = array<i64: 8, 1>}, {pipeline_mode = #tpu.pipeline_mode<synchronous>, transform_indices = @transform_3, window_bounds = array<i64: 8, 256>}, {transform_indices = @transform_4, window_bounds = array<i64: 8, 256>}]} {
    %c0 = arith.constant 0 : index
    %c0_0 = arith.constant 0 : index
    %0 = vector.load %arg1[%c0, %c0_0] : memref<8x256xf32, #tpu.memory_space<vmem>>, vector<8x256xf32>
    %c0_1 = arith.constant 0 : index
    %c4 = arith.constant 4 : index
    %1 = vector.load %arg2[%c0_1, %c4] : memref<8x9xf32, #tpu.memory_space<vmem>>, vector<8x1xf32>
    %2 = vector.broadcast %1 : vector<8x1xf32> to vector<8x256xf32>
    %3 = arith.mulf %0, %2 : vector<8x256xf32>
    %c17_i32 = arith.constant 17 : i32
    %4 = tpu.dynamic_rotate %0 by %c17_i32 dim 1 : vector<8x256xf32>, i32 -> vector<8x256xf32>
    %c0_2 = arith.constant 0 : index
    %c0_3 = arith.constant 0 : index
    %5 = vector.load %arg2[%c0_2, %c0_3] : memref<8x9xf32, #tpu.memory_space<vmem>>, vector<8x1xf32>
    %6 = vector.broadcast %5 : vector<8x1xf32> to vector<8x256xf32>
    %7 = arith.mulf %4, %6 : vector<8x256xf32>
    %c0_4 = arith.constant 0 : index
    %c0_5 = arith.constant 0 : index
    %8 = vector.load %arg4[%c0_4, %c0_5] : memref<8x256xf32, #tpu.memory_space<vmem>>, vector<1x256xf32>
    %9 = vector.broadcast %8 : vector<1x256xf32> to vector<8x256xf32>
    %10 = arith.mulf %7, %9 : vector<8x256xf32>
    %11 = arith.addf %3, %10 : vector<8x256xf32>
    %c16_i32 = arith.constant 16 : i32
    %12 = tpu.dynamic_rotate %0 by %c16_i32 dim 1 : vector<8x256xf32>, i32 -> vector<8x256xf32>
    %c0_6 = arith.constant 0 : index
    %c1 = arith.constant 1 : index
    %13 = vector.load %arg2[%c0_6, %c1] : memref<8x9xf32, #tpu.memory_space<vmem>>, vector<8x1xf32>
    %14 = vector.broadcast %13 : vector<8x1xf32> to vector<8x256xf32>
    %15 = arith.mulf %12, %14 : vector<8x256xf32>
    %c1_7 = arith.constant 1 : index
    %c0_8 = arith.constant 0 : index
    %16 = vector.load %arg4[%c1_7, %c0_8] : memref<8x256xf32, #tpu.memory_space<vmem>>, vector<1x256xf32>
    %17 = vector.broadcast %16 : vector<1x256xf32> to vector<8x256xf32>
    %18 = arith.mulf %15, %17 : vector<8x256xf32>
    %19 = arith.addf %11, %18 : vector<8x256xf32>
    %c15_i32 = arith.constant 15 : i32
    %20 = tpu.dynamic_rotate %0 by %c15_i32 dim 1 : vector<8x256xf32>, i32 -> vector<8x256xf32>
    %c0_9 = arith.constant 0 : index
    %c2 = arith.constant 2 : index
    %21 = vector.load %arg2[%c0_9, %c2] : memref<8x9xf32, #tpu.memory_space<vmem>>, vector<8x1xf32>
    %22 = vector.broadcast %21 : vector<8x1xf32> to vector<8x256xf32>
    %23 = arith.mulf %20, %22 : vector<8x256xf32>
    %c2_10 = arith.constant 2 : index
    %c0_11 = arith.constant 0 : index
    %24 = vector.load %arg4[%c2_10, %c0_11] : memref<8x256xf32, #tpu.memory_space<vmem>>, vector<1x256xf32>
    %25 = vector.broadcast %24 : vector<1x256xf32> to vector<8x256xf32>
    %26 = arith.mulf %23, %25 : vector<8x256xf32>
    %27 = arith.addf %19, %26 : vector<8x256xf32>
    %c1_i32 = arith.constant 1 : i32
    %28 = tpu.dynamic_rotate %0 by %c1_i32 dim 1 : vector<8x256xf32>, i32 -> vector<8x256xf32>
    %c0_12 = arith.constant 0 : index
    %c3 = arith.constant 3 : index
    %29 = vector.load %arg2[%c0_12, %c3] : memref<8x9xf32, #tpu.memory_space<vmem>>, vector<8x1xf32>
    %30 = vector.broadcast %29 : vector<8x1xf32> to vector<8x256xf32>
    %31 = arith.mulf %28, %30 : vector<8x256xf32>
    %c3_13 = arith.constant 3 : index
    %c0_14 = arith.constant 0 : index
    %32 = vector.load %arg4[%c3_13, %c0_14] : memref<8x256xf32, #tpu.memory_space<vmem>>, vector<1x256xf32>
    %33 = vector.broadcast %32 : vector<1x256xf32> to vector<8x256xf32>
    %34 = arith.mulf %31, %33 : vector<8x256xf32>
    %35 = arith.addf %27, %34 : vector<8x256xf32>
    %c255_i32 = arith.constant 255 : i32
    %36 = tpu.dynamic_rotate %0 by %c255_i32 dim 1 : vector<8x256xf32>, i32 -> vector<8x256xf32>
    %c0_15 = arith.constant 0 : index
    %c5 = arith.constant 5 : index
    %37 = vector.load %arg2[%c0_15, %c5] : memref<8x9xf32, #tpu.memory_space<vmem>>, vector<8x1xf32>
    %38 = vector.broadcast %37 : vector<8x1xf32> to vector<8x256xf32>
    %39 = arith.mulf %36, %38 : vector<8x256xf32>
    %c4_16 = arith.constant 4 : index
    %c0_17 = arith.constant 0 : index
    %40 = vector.load %arg4[%c4_16, %c0_17] : memref<8x256xf32, #tpu.memory_space<vmem>>, vector<1x256xf32>
    %41 = vector.broadcast %40 : vector<1x256xf32> to vector<8x256xf32>
    %42 = arith.mulf %39, %41 : vector<8x256xf32>
    %43 = arith.addf %35, %42 : vector<8x256xf32>
    %c241_i32 = arith.constant 241 : i32
    %44 = tpu.dynamic_rotate %0 by %c241_i32 dim 1 : vector<8x256xf32>, i32 -> vector<8x256xf32>
    %c0_18 = arith.constant 0 : index
    %c6 = arith.constant 6 : index
    %45 = vector.load %arg2[%c0_18, %c6] : memref<8x9xf32, #tpu.memory_space<vmem>>, vector<8x1xf32>
    %46 = vector.broadcast %45 : vector<8x1xf32> to vector<8x256xf32>
    %47 = arith.mulf %44, %46 : vector<8x256xf32>
    %c5_19 = arith.constant 5 : index
    %c0_20 = arith.constant 0 : index
    %48 = vector.load %arg4[%c5_19, %c0_20] : memref<8x256xf32, #tpu.memory_space<vmem>>, vector<1x256xf32>
    %49 = vector.broadcast %48 : vector<1x256xf32> to vector<8x256xf32>
    %50 = arith.mulf %47, %49 : vector<8x256xf32>
    %51 = arith.addf %43, %50 : vector<8x256xf32>
    %c240_i32 = arith.constant 240 : i32
    %52 = tpu.dynamic_rotate %0 by %c240_i32 dim 1 : vector<8x256xf32>, i32 -> vector<8x256xf32>
    %c0_21 = arith.constant 0 : index
    %c7 = arith.constant 7 : index
    %53 = vector.load %arg2[%c0_21, %c7] : memref<8x9xf32, #tpu.memory_space<vmem>>, vector<8x1xf32>
    %54 = vector.broadcast %53 : vector<8x1xf32> to vector<8x256xf32>
    %55 = arith.mulf %52, %54 : vector<8x256xf32>
    %c6_22 = arith.constant 6 : index
    %c0_23 = arith.constant 0 : index
    %56 = vector.load %arg4[%c6_22, %c0_23] : memref<8x256xf32, #tpu.memory_space<vmem>>, vector<1x256xf32>
    %57 = vector.broadcast %56 : vector<1x256xf32> to vector<8x256xf32>
    %58 = arith.mulf %55, %57 : vector<8x256xf32>
    %59 = arith.addf %51, %58 : vector<8x256xf32>
    %c239_i32 = arith.constant 239 : i32
    %60 = tpu.dynamic_rotate %0 by %c239_i32 dim 1 : vector<8x256xf32>, i32 -> vector<8x256xf32>
    %c0_24 = arith.constant 0 : index
    %c8 = arith.constant 8 : index
    %61 = vector.load %arg2[%c0_24, %c8] : memref<8x9xf32, #tpu.memory_space<vmem>>, vector<8x1xf32>
    %62 = vector.broadcast %61 : vector<8x1xf32> to vector<8x256xf32>
    %63 = arith.mulf %60, %62 : vector<8x256xf32>
    %c7_25 = arith.constant 7 : index
    %c0_26 = arith.constant 0 : index
    %64 = vector.load %arg4[%c7_25, %c0_26] : memref<8x256xf32, #tpu.memory_space<vmem>>, vector<1x256xf32>
    %65 = vector.broadcast %64 : vector<1x256xf32> to vector<8x256xf32>
    %66 = arith.mulf %63, %65 : vector<8x256xf32>
    %67 = arith.addf %59, %66 : vector<8x256xf32>
    %c0_27 = arith.constant 0 : index
    %c0_28 = arith.constant 0 : index
    %68 = vector.load %arg3[%c0_27, %c0_28] : memref<8x1xf32, #tpu.memory_space<vmem>>, vector<8x1xf32>
    %69 = vector.broadcast %68 : vector<8x1xf32> to vector<8x256xf32>
    %70 = arith.addf %67, %69 : vector<8x256xf32>
    %c0_29 = arith.constant 0 : index
    %c0_30 = arith.constant 0 : index
    %71 = vector.load %arg5[%c0_29, %c0_30] : memref<8x256xf32, #tpu.memory_space<vmem>>, vector<8x256xf32>
    tpu.vector_store %arg5[%c0_29, %c0_30], %70 {strides = array<i32>} : memref<8x256xf32, #tpu.memory_space<vmem>>, vector<8x256xf32>,
    return
  }
  func.func @transform_0(%arg0: i32) -> (i32, i32) {
    %c0_i32 = arith.constant 0 : i32
    %c0_i32_0 = arith.constant 0 : i32
    return %arg0, %c0_i32 : i32, i32
  }
  func.func @transform_1(%arg0: i32) -> (i32, i32) {
    %c0_i32 = arith.constant 0 : i32
    %c0_i32_0 = arith.constant 0 : i32
    return %arg0, %c0_i32 : i32, i32
  }
  func.func @transform_2(%arg0: i32) -> (i32, i32) {
    %c0_i32 = arith.constant 0 : i32
    %c0_i32_0 = arith.constant 0 : i32
    return %arg0, %c0_i32 : i32, i32
  }
  func.func @transform_3(%arg0: i32) -> (i32, i32) {
    %c0_i32 = arith.constant 0 : i32
    %c0_i32_0 = arith.constant 0 : i32
    %c0_i32_1 = arith.constant 0 : i32
    return %c0_i32, %c0_i32_0 : i32, i32
  }
  func.func @transform_4(%arg0: i32) -> (i32, i32) {
    %c0_i32 = arith.constant 0 : i32
    %c0_i32_0 = arith.constant 0 : i32
    return %arg0, %c0_i32 : i32, i32
  }
}

</mosaic_0001>

<llo_original>
// kernel: residual_forward.1
$region0: #{residual_forward.1}
  #allocation0 [shape = 'u32[]', space=smem, size = 0x4, offset = 0x4, fixed_abs, tag = 'smem constant byte address 0x4 - core index']
  #allocation1 [shape = 'u32[144,128]{1,0:T(1,128)}', space=vmem, size = 0x12000, scoped, tag = 'internal scratch']
  %s0 = inlined_call_operand.vmem [shape: f32[8,256], index: 0, kind: input, shape index: {}]
  %s1 = inlined_call_operand.vmem [shape: f32[8,9], index: 1, kind: input, shape index: {}]
  %s2 = inlined_call_operand.vmem [shape: f32[8,1], index: 2, kind: input, shape index: {}]
  %s3 = inlined_call_operand.vmem [shape: f32[8,256], index: 3, kind: input, shape index: {}]
  %s4 = inlined_call_operand.vmem [shape: f32[8,256], index: 4, kind: output, shape index: {}]
  %s5 = sld [smem:[#allocation0]]
  $region26: #{residual_forward.1} parent=0
    _
  %s7 = ssub.s32 1, %s5
  %s8 = scalar_select 0, %s7, %s5
  // Predicated region
  $region2: #{residual_forward.1} parent=0 // pred_check
    _
  $region3: #{residual_forward.1} parent=0 // pred_check_branch
    %10 = sbr.rel (0) target = $region5
  $region4: #{residual_forward.1} parent=0 // pred_region
    _
  $region5: #{residual_forward.1} parent=0 // pred_fallthru
    _
  // Predicated region
  $region6: #{residual_forward.1} parent=0 // pred_check
    _
  $region7: #{residual_forward.1} parent=0 // pred_check_branch
    %12 = sbr.rel (0) target = $region9
  $region8: #{residual_forward.1} parent=0 // pred_region
    _
  $region9: #{residual_forward.1} parent=0 // pred_fallthru
    _
  // Predicated region
  $region10: #{residual_forward.1} parent=0 // pred_check
    _
  $region11: #{residual_forward.1} parent=0 // pred_check_branch
    %14 = sbr.rel (0) target = $region13
  $region12: #{residual_forward.1} parent=0 // pred_region
    _
  $region13: #{residual_forward.1} parent=0 // pred_fallthru
    _
  // Predicated region
  $region14: #{residual_forward.1} parent=0 // pred_check
    _
  $region15: #{residual_forward.1} parent=0 // pred_check_branch
    %16 = sbr.rel (0) target = $region17
  $region16: #{residual_forward.1} parent=0 // pred_region
    _
  $region17: #{residual_forward.1} parent=0 // pred_fallthru
    _
  %v17 = vld [vmem:[%s0] sm:$0xff]
  %v18 = vld [vmem:[%s0 + $0x8] sm:$0xff]
  %v19 = vld [vmem:[%s1] sm:$0xff]
  %21 = vset.pattern.permute.xlu0 4
  %22 = vperm.xlu0 %21, %v19
  %v23 = vpop.permute.xlu0 %22
  %v25 = vmul.f32 %v17, %v23
  %v26 = vmul.f32 %v18, %v23
  %27 = vrot.lane.b32.xlu0 %v17, 17
  %v28 = vpop.permute.xlu0 %27
  %29 = vrot.lane.b32.xlu0 %v18, 17
  %v30 = vpop.permute.xlu0 %29
  %v31 = vlaneseq
  %v32 = vand.u32 %v31, 127
  %vm33 = vcmp.lt.s32.totalorder %v32, 17
  %v34 = vsel %vm33, %v28, %v30
  %v35 = vsel %vm33, %v30, %v28
  %36 = vset.pattern.permute.xlu0 0
  %37 = vperm.xlu0 %36, %v19
  %v38 = vpop.permute.xlu0 %37
  %v40 = vmul.f32 %v35, %v38
  %v41 = vmul.f32 %v34, %v38
  %v42 = vld [vmem:[%s3] ss:$8 sm:$0x3]
  %v44 = vlaneseq
  %v45 = vshrl.u32 %v44, 7
  %v46 = vsub.s32 0, %v45
  %v47 = vrot.slane %v42, %v46
  %v48 = vlaneseq
  %v49 = vshrl.u32 %v48, 7
  %v50 = vsub.s32 1, %v49
  %v51 = vrot.slane %v42, %v50
  %v54 = vmul.f32 %v40, %v47
  %v55 = vmul.f32 %v41, %v51
  %v56 = vadd.f32 %v25, %v54
  %v57 = vadd.f32 %v26, %v55
  %58 = vrot.lane.b32.xlu0 %v17, 16
  %v59 = vpop.permute.xlu0 %58
  %60 = vrot.lane.b32.xlu0 %v18, 16
  %v61 = vpop.permute.xlu0 %60
  %vm62 = vcmp.lt.s32.totalorder %v32, 16
  %v63 = vsel %vm62, %v59, %v61
  %v64 = vsel %vm62, %v61, %v59
  %65 = vset.pattern.permute.xlu0 1
  %66 = vperm.xlu0 %65, %v19
  %v67 = vpop.permute.xlu0 %66
  %v69 = vmul.f32 %v64, %v67
  %v70 = vmul.f32 %v63, %v67
  %s71 = scalar_lea.vmem %s3, 1
  %v72 = vld [vmem:[%s71] ss:$8 sm:$0x3]
  %v74 = vlaneseq
  %v75 = vshrl.u32 %v74, 7
  %v76 = vsub.s32 0, %v75
  %v77 = vrot.slane %v72, %v76
  %v78 = vlaneseq
  %v79 = vshrl.u32 %v78, 7
  %v80 = vsub.s32 1, %v79
  %v81 = vrot.slane %v72, %v80
  %v84 = vmul.f32 %v69, %v77
  %v85 = vmul.f32 %v70, %v81
  %v86 = vadd.f32 %v56, %v84
  %v87 = vadd.f32 %v57, %v85
  %88 = vrot.lane.b32.xlu0 %v17, 15
  %v89 = vpop.permute.xlu0 %88
  %90 = vrot.lane.b32.xlu0 %v18, 15
  %v91 = vpop.permute.xlu0 %90
  %vm92 = vcmp.lt.s32.totalorder %v32, 15
  %v93 = vsel %vm92, %v89, %v91
  %v94 = vsel %vm92, %v91, %v89
  %95 = vset.pattern.permute.xlu0 2
  %96 = vperm.xlu0 %95, %v19
  %v97 = vpop.permute.xlu0 %96
  %v99 = vmul.f32 %v94, %v97
  %v100 = vmul.f32 %v93, %v97
  %s101 = scalar_lea.vmem %s3, 2
  %v102 = vld [vmem:[%s101] ss:$8 sm:$0x3]
  %v104 = vlaneseq
  %v105 = vshrl.u32 %v104, 7
  %v106 = vsub.s32 0, %v105
  %v107 = vrot.slane %v102, %v106
  %v108 = vlaneseq
  %v109 = vshrl.u32 %v108, 7
  %v110 = vsub.s32 1, %v109
  %v111 = vrot.slane %v102, %v110
  %v114 = vmul.f32 %v99, %v107
  %v115 = vmul.f32 %v100, %v111
  %v116 = vadd.f32 %v86, %v114
  %v117 = vadd.f32 %v87, %v115
  %118 = vrot.lane.b32.xlu0 %v17, 1
  %v119 = vpop.permute.xlu0 %118
  %120 = vrot.lane.b32.xlu0 %v18, 1
  %v121 = vpop.permute.xlu0 %120
  %vm122 = vcmp.lt.s32.totalorder %v32, 1
  %v123 = vsel %vm122, %v119, %v121
  %v124 = vsel %vm122, %v121, %v119
  %125 = vset.pattern.permute.xlu0 3
  %126 = vperm.xlu0 %125, %v19
  %v127 = vpop.permute.xlu0 %126
  %v129 = vmul.f32 %v124, %v127
  %v130 = vmul.f32 %v123, %v127
  %s131 = scalar_lea.vmem %s3, 3
  %v132 = vld [vmem:[%s131] ss:$8 sm:$0x3]
  %v134 = vlaneseq
  %v135 = vshrl.u32 %v134, 7
  %v136 = vsub.s32 0, %v135
  %v137 = vrot.slane %v132, %v136
  %v138 = vlaneseq
  %v139 = vshrl.u32 %v138, 7
  %v140 = vsub.s32 1, %v139
  %v141 = vrot.slane %v132, %v140
  %v144 = vmul.f32 %v129, %v137
  %v145 = vmul.f32 %v130, %v141
  %v146 = vadd.f32 %v116, %v144
  %v147 = vadd.f32 %v117, %v145
  %148 = vrot.lane.b32.xlu0 %v17, 127
  %v149 = vpop.permute.xlu0 %148
  %150 = vrot.lane.b32.xlu0 %v18, 127
  %v151 = vpop.permute.xlu0 %150
  %vm152 = vcmp.lt.s32.totalorder %v32, 127
  %v153 = vsel %vm152, %v149, %v151
  %v154 = vsel %vm152, %v151, %v149
  %155 = vset.pattern.permute.xlu0 5
  %156 = vperm.xlu0 %155, %v19
  %v157 = vpop.permute.xlu0 %156
  %v159 = vmul.f32 %v153, %v157
  %v160 = vmul.f32 %v154, %v157
  %s161 = scalar_lea.vmem %s3, 4
  %v162 = vld [vmem:[%s161] ss:$8 sm:$0x3]
  %v164 = vlaneseq
  %v165 = vshrl.u32 %v164, 7
  %v166 = vsub.s32 0, %v165
  %v167 = vrot.slane %v162, %v166
  %v168 = vlaneseq
  %v169 = vshrl.u32 %v168, 7
  %v170 = vsub.s32 1, %v169
  %v171 = vrot.slane %v162, %v170
  %v174 = vmul.f32 %v159, %v167
  %v175 = vmul.f32 %v160, %v171
  %v176 = vadd.f32 %v146, %v174
  %v177 = vadd.f32 %v147, %v175
  %178 = vrot.lane.b32.xlu0 %v17, 113
  %v179 = vpop.permute.xlu0 %178
  %180 = vrot.lane.b32.xlu0 %v18, 113
  %v181 = vpop.permute.xlu0 %180
  %vm182 = vcmp.lt.s32.totalorder %v32, 113
  %v183 = vsel %vm182, %v179, %v181
  %v184 = vsel %vm182, %v181, %v179
  %185 = vset.pattern.permute.xlu0 6
  %186 = vperm.xlu0 %185, %v19
  %v187 = vpop.permute.xlu0 %186
  %v189 = vmul.f32 %v183, %v187
  %v190 = vmul.f32 %v184, %v187
  %s191 = scalar_lea.vmem %s3, 5
  %v192 = vld [vmem:[%s191] ss:$8 sm:$0x3]
  %v194 = vlaneseq
  %v195 = vshrl.u32 %v194, 7
  %v196 = vsub.s32 0, %v195
  %v197 = vrot.slane %v192, %v196
  %v198 = vlaneseq
  %v199 = vshrl.u32 %v198, 7
  %v200 = vsub.s32 1, %v199
  %v201 = vrot.slane %v192, %v200
  %v204 = vmul.f32 %v189, %v197
  %v205 = vmul.f32 %v190, %v201
  %v206 = vadd.f32 %v176, %v204
  %v207 = vadd.f32 %v177, %v205
  %208 = vrot.lane.b32.xlu0 %v17, 112
  %v209 = vpop.permute.xlu0 %208
  %210 = vrot.lane.b32.xlu0 %v18, 112
  %v211 = vpop.permute.xlu0 %210
  %vm212 = vcmp.lt.s32.totalorder %v32, 112
  %v213 = vsel %vm212, %v209, %v211
  %v214 = vsel %vm212, %v211, %v209
  %215 = vset.pattern.permute.xlu0 7
  %216 = vperm.xlu0 %215, %v19
  %v217 = vpop.permute.xlu0 %216
  %v219 = vmul.f32 %v213, %v217
  %v220 = vmul.f32 %v214, %v217
  %s221 = scalar_lea.vmem %s3, 6
  %v222 = vld [vmem:[%s221] ss:$8 sm:$0x3]
  %v224 = vlaneseq
  %v225 = vshrl.u32 %v224, 7
  %v226 = vsub.s32 0, %v225
  %v227 = vrot.slane %v222, %v226
  %v228 = vlaneseq
  %v229 = vshrl.u32 %v228, 7
  %v230 = vsub.s32 1, %v229
  %v231 = vrot.slane %v222, %v230
  %v234 = vmul.f32 %v219, %v227
  %v235 = vmul.f32 %v220, %v231
  %v236 = vadd.f32 %v206, %v234
  %v237 = vadd.f32 %v207, %v235
  %238 = vrot.lane.b32.xlu0 %v17, 111
  %v239 = vpop.permute.xlu0 %238
  %240 = vrot.lane.b32.xlu0 %v18, 111
  %v241 = vpop.permute.xlu0 %240
  %vm242 = vcmp.lt.s32.totalorder %v32, 111
  %v243 = vsel %vm242, %v239, %v241
  %v244 = vsel %vm242, %v241, %v239
  %245 = vset.pattern.permute.xlu0 8
  %246 = vperm.xlu0 %245, %v19
  %v247 = vpop.permute.xlu0 %246
  %v249 = vmul.f32 %v243, %v247
  %v250 = vmul.f32 %v244, %v247
  %s251 = scalar_lea.vmem %s3, 7
  %v252 = vld [vmem:[%s251] ss:$8 sm:$0x3]
  %v254 = vlaneseq
  %v255 = vshrl.u32 %v254, 7
  %v256 = vsub.s32 0, %v255
  %v257 = vrot.slane %v252, %v256
  %v258 = vlaneseq
  %v259 = vshrl.u32 %v258, 7
  %v260 = vsub.s32 1, %v259
  %v261 = vrot.slane %v252, %v260
  %v264 = vmul.f32 %v249, %v257
  %v265 = vmul.f32 %v250, %v261
  %v266 = vadd.f32 %v236, %v264
  %v267 = vadd.f32 %v237, %v265
  %v268 = vld [vmem:[%s2] sm:$0xff]
  %270 = vset.pattern.permute.xlu0 0
  %271 = vperm.xlu0 %270, %v268
  %v272 = vpop.permute.xlu0 %271
  %v274 = vadd.f32 %v266, %v272
  %v275 = vadd.f32 %v267, %v272
  %276 = vst [vmem:[%s4] sm:$0xff] %v274
  %277 = vst [vmem:[%s4 + $0x8] sm:$0xff] %v275
  // Predicated region
  $region18: #{residual_forward.1} parent=0 // pred_check
    _
  $region19: #{residual_forward.1} parent=0 // pred_check_branch
    %279 = sbr.rel (0) target = $region21
  $region20: #{residual_forward.1} parent=0 // pred_region
    _
  $region21: #{residual_forward.1} parent=0 // pred_fallthru
    _
  // Predicated region
  $region22: #{residual_forward.1} parent=0 // pred_check
    _
  $region23: #{residual_forward.1} parent=0 // pred_check_branch
    %281 = sbr.rel (0) target = $region25
  $region24: #{residual_forward.1} parent=0 // pred_region
    _
  $region25: #{residual_forward.1} parent=0 // pred_fallthru
    _

</llo_original>
